<compile_context>
chip_gen: v6e
topology: v6e:2x2x1
jax: 0.10.0
libtpu: 0.0.40
codegen_flags: <defaults>
</compile_context>

<pallas_src>
from functools import partial

import jax
import jax.numpy as jnp
from jax.experimental import pallas as pl
from jax.experimental.pallas import tpu as pltpu

_LANE = 128
_SUBLANE = 8


def _round_up(x, m):
    return ((x + m - 1) // m) * m


def _actor_kernel(state_ref, wb_ref, mu_ref, std_ref):
    # state_ref: [bt, 1]        (batch on sublanes)
    # wb_ref:    [8, Ap]        rows: 0 mean_w', 1 mean_b', 2 ls_w', 3 ls_b'
    # mu_ref:    [bt, Ap]
    # std_ref:   [bt, Ap]
    s = state_ref[...]                                  # [bt, 1]
    wb = wb_ref[...]                                    # [8, Ap]

    # mean head (feats already folded into w'/b'): rank-1 FMA on the VPU.
    mu_ref[...] = (s * wb[0:1, :] + wb[1:2, :]).astype(mu_ref.dtype)

    # log_std head: clamp + exp (EUP) only on the std half.
    log_std = s * wb[2:3, :] + wb[3:4, :]
    std_ref[...] = jnp.exp(jnp.clip(log_std, -10.0, 10.0)).astype(std_ref.dtype)


def pack_params(params):
    """One-time re-layout + feats-folding of torch-layout params.

    Folds feats (Linear(1,1): x = wf*s + bf) into the two heads:
        mu      = s*(mean_w*wf)   + (mean_w*bf + mean_b)
        log_std = s*(log_std_w*wf) + (log_std_w*bf + log_std_b)

    Returns:
      wb: [8, Ap] float32 (Ap = action_size rounded up to 128 lanes),
          rows = [mean_w', mean_b', log_std_w', log_std_b', 0, 0, 0, 0].
    """
    wf = params["feat_w"][0, 0].astype(jnp.float32)
    bf = params["feat_b"][0].astype(jnp.float32)
    mw = params["mean_w"][:, 0].astype(jnp.float32)
    mb = params["mean_b"].astype(jnp.float32)
    lw = params["log_std_w"][:, 0].astype(jnp.float32)
    lb = params["log_std_b"].astype(jnp.float32)

    a = mw.shape[0]
    ap = _round_up(a, _LANE)

    def pad(v):
        return jnp.pad(v, (0, ap - a))

    rows = jnp.stack([pad(mw * wf), pad(mw * bf + mb),
                      pad(lw * wf), pad(lw * bf + lb)], axis=0)   # [4, Ap]
    return jnp.pad(rows, ((0, _SUBLANE - 4), (0, 0)))             # [8, Ap]


@partial(jax.jit, static_argnames=("action_size", "block_b"))
def actor_forward(state, wb, action_size, block_b=2048):
    """state: [B, 1]; wb from pack_params. Returns (mu, std), each [B, action_size]."""
    B = state.shape[0]
    assert state.shape[1] == 1, "actor_feat_size must be 1 (feats = Linear(1, 1))"
    ap = wb.shape[1]

    # Batch on sublanes: one big block for B <= block_b (single grid step on
    # v5e/v6e); larger batches tile along a "parallel" axis (v7x 2 TCs).
    bt = _round_up(min(block_b, B), _SUBLANE)
    grid = (pl.cdiv(B, bt),)

    state_f = state.astype(jnp.float32)

    cost = pl.CostEstimate(
        flops=4 * B * ap,                       # two rank-1 FMAs per head
        transcendentals=B * ap,                 # exp on the std half only
        bytes_accessed=4 * (B + _SUBLANE * ap + 2 * B * ap),
    )

    mu, std = pl.pallas_call(
        _actor_kernel,
        out_shape=(jax.ShapeDtypeStruct((B, ap), jnp.float32),
                   jax.ShapeDtypeStruct((B, ap), jnp.float32)),
        grid=grid,
        in_specs=[
            pl.BlockSpec((bt, 1), lambda i: (i, 0)),        # state: [B, 1]
            pl.BlockSpec((_SUBLANE, ap), lambda i: (0, 0)),  # wb: resident
        ],
        out_specs=(
            pl.BlockSpec((bt, ap), lambda i: (i, 0)),        # mu
            pl.BlockSpec((bt, ap), lambda i: (i, 0)),        # std
        ),
        compiler_params=pltpu.CompilerParams(
            dimension_semantics=("parallel",)),
        cost_estimate=cost,
    )(state_f, wb)

    # Only a cheap lane-slice remains (padding columns carry zero params).
    return mu[:, :action_size], std[:, :action_size]


def init_params(key, actor_feat_size=1, action_size=8):
    """Deterministic synthetic parameters with PyTorch Linear layouts."""
    ks = jax.random.split(key, 6)

    def lin(kw, kb, fan_in, fan_out):
        bound = 1.0 / jnp.sqrt(fan_in)
        w = jax.random.uniform(kw, (fan_out, fan_in), jnp.float32, -bound, bound)
        b = jax.random.uniform(kb, (fan_out,), jnp.float32, -bound, bound)
        return w, b

    feat_w, feat_b = lin(ks[0], ks[1], 1, 1)                      # MLP(1, [], 1)
    mean_w, mean_b = lin(ks[2], ks[3], actor_feat_size, action_size)
    ls_w, ls_b = lin(ks[4], ks[5], actor_feat_size, action_size)
    return {
        "feat_w": feat_w, "feat_b": feat_b,
        "mean_w": mean_w, "mean_b": mean_b,
        "log_std_w": ls_w, "log_std_b": ls_b,
    }


def _reference(state, p):
    x = state @ p["feat_w"].T + p["feat_b"]
    mu = x @ p["mean_w"].T + p["mean_b"]
    log_std = jnp.clip(x @ p["log_std_w"].T + p["log_std_b"], -10.0, 10.0)
    return mu, jnp.exp(log_std)


if __name__ == "__main__":
    key = jax.random.PRNGKey(0)
    k_state, k_params = jax.random.split(key)

    B, F, A = 8, 1, 8          # batch, actor_feat_size (=1 by module design), action_size
    state = jax.random.normal(k_state, (B, F), jnp.float32)
    params = init_params(k_params, actor_feat_size=F, action_size=A)

    wb = pack_params(params)                 # one-time re-layout + feats folding
    mu, std = actor_forward(state, wb, action_size=A)
    jax.block_until_ready((mu, std))

    mu_ref, std_ref = _reference(state, params)
    assert mu.shape == (B, A) and std.shape == (B, A)
    assert jnp.allclose(mu, mu_ref, atol=1e-5, rtol=1e-5)
    assert jnp.allclose(std, std_ref, atol=1e-5, rtol=1e-5)
    print("KERNEL_OK")
</pallas_src>

<mosaic_0001>
module attributes {stable_mosaic.version = 11 : i64} {
  func.func @_actor_kernel(%arg0: i32, %arg1: memref<8x1xf32, #tpu.memory_space<vmem>>, %arg2: memref<8x128xf32, #tpu.memory_space<vmem>>, %arg3: memref<8x128xf32, #tpu.memory_space<vmem>>, %arg4: memref<8x128xf32, #tpu.memory_space<vmem>>) attributes {dimension_semantics = [#tpu.dimension_semantics<parallel>], iteration_bounds = array<i64: 1>, scalar_prefetch = 0 : i64, scratch_operands = 0 : i64, tpu.core_type = #tpu.core_type<tc>, window_params = [{transform_indices = @transform_0, window_bounds = array<i64: 8, 1>}, {pipeline_mode = #tpu.pipeline_mode<synchronous>, transform_indices = @transform_1, window_bounds = array<i64: 8, 128>}, {transform_indices = @transform_2, window_bounds = array<i64: 8, 128>}, {transform_indices = @transform_3, window_bounds = array<i64: 8, 128>}]} {
    %c0 = arith.constant 0 : index
    %c0_0 = arith.constant 0 : index
    %0 = vector.load %arg1[%c0, %c0_0] : memref<8x1xf32, #tpu.memory_space<vmem>>, vector<8x1xf32>
    %c0_1 = arith.constant 0 : index
    %c0_2 = arith.constant 0 : index
    %1 = vector.load %arg2[%c0_1, %c0_2] : memref<8x128xf32, #tpu.memory_space<vmem>>, vector<8x128xf32>
    %2 = vector.extract_strided_slice %1 {offsets = [0, 0], sizes = [1, 128], strides = [1, 1]} : vector<8x128xf32> to vector<1x128xf32>
    %3 = vector.broadcast %0 : vector<8x1xf32> to vector<8x128xf32>
    %4 = vector.broadcast %2 : vector<1x128xf32> to vector<8x128xf32>
    %5 = arith.mulf %3, %4 : vector<8x128xf32>
    %6 = vector.extract_strided_slice %1 {offsets = [1, 0], sizes = [1, 128], strides = [1, 1]} : vector<8x128xf32> to vector<1x128xf32>
    %7 = vector.broadcast %6 : vector<1x128xf32> to vector<8x128xf32>
    %8 = arith.addf %5, %7 : vector<8x128xf32>
    %c0_3 = arith.constant 0 : index
    %c0_4 = arith.constant 0 : index
    %9 = vector.load %arg3[%c0_3, %c0_4] : memref<8x128xf32, #tpu.memory_space<vmem>>, vector<8x128xf32>
    tpu.vector_store %arg3[%c0_3, %c0_4], %8 {strides = array<i32>} : memref<8x128xf32, #tpu.memory_space<vmem>>, vector<8x128xf32>,
    %10 = vector.extract_strided_slice %1 {offsets = [2, 0], sizes = [1, 128], strides = [1, 1]} : vector<8x128xf32> to vector<1x128xf32>
    %11 = vector.broadcast %0 : vector<8x1xf32> to vector<8x128xf32>
    %12 = vector.broadcast %10 : vector<1x128xf32> to vector<8x128xf32>
    %13 = arith.mulf %11, %12 : vector<8x128xf32>
    %14 = vector.extract_strided_slice %1 {offsets = [3, 0], sizes = [1, 128], strides = [1, 1]} : vector<8x128xf32> to vector<1x128xf32>
    %15 = vector.broadcast %14 : vector<1x128xf32> to vector<8x128xf32>
    %16 = arith.addf %13, %15 : vector<8x128xf32>
    %cst = arith.constant -1.000000e+01 : f32
    %cst_5 = arith.constant 1.000000e+01 : f32
    %17 = vector.broadcast %cst : f32 to vector<8x128xf32>
    %18 = arith.maximumf %17, %16 : vector<8x128xf32>
    %19 = vector.broadcast %cst_5 : f32 to vector<8x128xf32>
    %20 = arith.minimumf %19, %18 : vector<8x128xf32>
    %21 = math.exp %20 : vector<8x128xf32>
    %c0_6 = arith.constant 0 : index
    %c0_7 = arith.constant 0 : index
    %22 = vector.load %arg4[%c0_6, %c0_7] : memref<8x128xf32, #tpu.memory_space<vmem>>, vector<8x128xf32>
    tpu.vector_store %arg4[%c0_6, %c0_7], %21 {strides = array<i32>} : memref<8x128xf32, #tpu.memory_space<vmem>>, vector<8x128xf32>,
    return
  }
  func.func @transform_0(%arg0: i32) -> (i32, i32) {
    %c0_i32 = arith.constant 0 : i32
    %c0_i32_0 = arith.constant 0 : i32
    return %arg0, %c0_i32 : i32, i32
  }
  func.func @transform_1(%arg0: i32) -> (i32, i32) {
    %c0_i32 = arith.constant 0 : i32
    %c0_i32_0 = arith.constant 0 : i32
    %c0_i32_1 = arith.constant 0 : i32
    return %c0_i32, %c0_i32_0 : i32, i32
  }
  func.func @transform_2(%arg0: i32) -> (i32, i32) {
    %c0_i32 = arith.constant 0 : i32
    %c0_i32_0 = arith.constant 0 : i32
    return %arg0, %c0_i32 : i32, i32
  }
  func.func @transform_3(%arg0: i32) -> (i32, i32) {
    %c0_i32 = arith.constant 0 : i32
    %c0_i32_0 = arith.constant 0 : i32
    return %arg0, %c0_i32 : i32, i32
  }
}

</mosaic_0001>

<llo_original>
// kernel: actor_forward.1
$region0: #{actor_forward.1}
  #allocation0 [shape = 'u32[]', space=smem, size = 0x4, offset = 0x4, fixed_abs, tag = 'smem constant byte address 0x4 - core index']
  #allocation1 [shape = 'u32[144,128]{1,0:T(1,128)}', space=vmem, size = 0x12000, scoped, tag = 'internal scratch']
  %s0 = inlined_call_operand.vmem [shape: f32[8,1], index: 0, kind: input, shape index: {}]
  %s1 = inlined_call_operand.vmem [shape: f32[8,128], index: 1, kind: input, shape index: {}]
  %s2 = inlined_call_operand.hbm [shape: f32[8,128], index: 2, kind: output, shape index: {0}]
  %s3 = inlined_call_operand.hbm [shape: f32[8,128], index: 3, kind: output, shape index: {1}]
  %4 = xla_tuple %s2, %s3
  %s5 = sld [smem:[#allocation0]]
  $region26: #{actor_forward.1} parent=0
    _
  %s7 = ssub.s32 1, %s5
  %s8 = scalar_select 0, %s7, %s5
  $region1: #{actor_forward.1} parent=0
    #allocation2 [shape = 'u8[4096]{0}', space=vmem, size = 0x1000, scoped, tag = 'output window, operand 0, single buffered']
    #allocation3 [shape = 's32[1]{0}', space=sflag, size = 0x4, scoped, tag = 'scoped memory for actor_forward.1']
    #allocation4 [shape = 'u8[4096]{0}', space=vmem, size = 0x1000, scoped, tag = 'output window, operand 1, single buffered']
    #allocation5 [shape = 's32[1]{0}', space=sflag, size = 0x4, scoped, tag = 'scoped memory for actor_forward.1']
    %9 = vsyncpa [#allocation3], 0
    %10 = vsyncpa [#allocation5], 0
    // Predicated region
    $region2: #{actor_forward.1} parent=1 // pred_check
      _
    $region3: #{actor_forward.1} parent=1 // pred_check_branch
      %12 = sbr.rel (0) target = $region5
    $region4: #{actor_forward.1} parent=1 // pred_region
      _
    $region5: #{actor_forward.1} parent=1 // pred_fallthru
      _
    // Predicated region
    $region6: #{actor_forward.1} parent=1 // pred_check
      _
    $region7: #{actor_forward.1} parent=1 // pred_check_branch
      %14 = sbr.rel (0) target = $region9
    $region8: #{actor_forward.1} parent=1 // pred_region
      _
    $region9: #{actor_forward.1} parent=1 // pred_fallthru
      _
    %v15 = vld [vmem:[%s0] sm:$0xff]
    %v16 = vld [vmem:[%s1] sm:$0xff]
    %18 = vset.pattern.permute.xlu0 0
    %19 = vperm.xlu0 %18, %v15
    %v20 = vpop.permute.xlu0 %19
    %v22 = vlaneseq
    %v23 = vshrl.u32 %v22, 7
    %v24 = vsub.s32 0, %v23
    %v25 = vrot.slane %v16, %v24
    %v26 = vmul.f32 %v20, %v25
    %v27 = vlaneseq
    %v28 = vshrl.u32 %v27, 7
    %v29 = vsub.s32 1, %v28
    %v30 = vrot.slane %v16, %v29
    %v31 = vadd.f32 %v26, %v30
    %32 = vst [vmem:[#allocation2] sm:$0xff] %v31
    %v33 = vlaneseq
    %v34 = vshrl.u32 %v33, 7
    %v35 = vsub.s32 2, %v34
    %v36 = vrot.slane %v16, %v35
    %v37 = vmul.f32 %v20, %v36
    %v38 = vlaneseq
    %v39 = vshrl.u32 %v38, 7
    %v40 = vsub.s32 3, %v39
    %v41 = vrot.slane %v16, %v40
    %v42 = vadd.f32 %v37, %v41
    %v43 = vmax.f32 %v42, -10.0
    %v44 = vmin.f32 %v43, 10.0
    %v45 = vmul.f32 %v44, 1.442695
    %v46 = vpow.pop %v45
    %47 = vst [vmem:[#allocation4] sm:$0xff] %v46
    // Predicated region
    $region10: #{actor_forward.1} parent=1 // pred_check
      _
    $region11: #{actor_forward.1} parent=1 // pred_check_branch
      %49 = sbr.rel (0) target = $region13
    $region12: #{actor_forward.1} parent=1 // pred_region
      %s51 = ssub.s32 128, 128
      %52 = vsyncadd [#allocation3], %s51
      %s54 = sshll.u32 [#allocation2], 4
      %s55 = int_to_ptr.vmem [resolvable:$true] %s54
      %57 = dma.vmem_to_hbm [thread:$0]  %s55, 128, %s2, [#allocation3]
    $region13: #{actor_forward.1} parent=1 // pred_fallthru
      _
    // Predicated region
    $region14: #{actor_forward.1} parent=1 // pred_check
      _
    $region15: #{actor_forward.1} parent=1 // pred_check_branch
      %59 = sbr.rel (0) target = $region17
    $region16: #{actor_forward.1} parent=1 // pred_region
      %s61 = ssub.s32 128, 128
      %62 = vsyncadd [#allocation5], %s61
      %s64 = sshll.u32 [#allocation4], 4
      %s65 = int_to_ptr.vmem [resolvable:$true] %s64
      %67 = dma.vmem_to_hbm [thread:$0]  %s65, 128, %s3, [#allocation5]
    $region17: #{actor_forward.1} parent=1 // pred_fallthru
      _
    // Predicated region
    $region18: #{actor_forward.1} parent=1 // pred_check
      _
    $region19: #{actor_forward.1} parent=1 // pred_check_branch
      %69 = sbr.rel (0) target = $region21
    $region20: #{actor_forward.1} parent=1 // pred_region
      %70 = dma.done [#allocation3], 128
    $region21: #{actor_forward.1} parent=1 // pred_fallthru
      _
    // Predicated region
    $region22: #{actor_forward.1} parent=1 // pred_check
      _
    $region23: #{actor_forward.1} parent=1 // pred_check_branch
      %72 = sbr.rel (0) target = $region25
    $region24: #{actor_forward.1} parent=1 // pred_region
      %73 = dma.done [#allocation5], 128
    $region25: #{actor_forward.1} parent=1 // pred_fallthru
      _
    %74 = vsyncpa [#allocation3], 1
    %75 = vsyncpa [#allocation5], 1

</llo_original>
